<compile_context>
chip_gen: v5e
topology: v5e:2x2
jax: 0.10.0
libtpu: 0.0.40
codegen_flags: <defaults>
</compile_context>

<pallas_src>
import functools

import jax
import jax.numpy as jnp
from jax.experimental import pallas as pl
from jax.experimental.pallas import tpu as pltpu


# ---------------------------------------------------------------------------
# Kernels
# ---------------------------------------------------------------------------

def _linear_kernel_single_k(x_ref, w_ref, b_ref, o_ref):
    """One-shot (tm, tn) output tile when the whole K dim fits one block.

    x_ref: [tm, K]   w_ref: [K, tn]   b_ref: [1, tn]   o_ref: [tm, tn]
    """
    acc = jnp.dot(x_ref[...].astype(w_ref.dtype), w_ref[...],
                  preferred_element_type=jnp.float32)
    o_ref[...] = (acc + b_ref[...].astype(jnp.float32)).astype(o_ref.dtype)


def _linear_kernel_tiled_k(x_ref, w_ref, b_ref, o_ref, acc_ref):
    """(tm, tn) output tile accumulated over the K grid axis.

    x_ref: [tm, tk]   w_ref: [tk, tn]   b_ref: [1, tn]
    o_ref: [tm, tn]   acc_ref: [tm, tn] f32 scratch
    """
    k = pl.program_id(2)

    @pl.when(k == 0)
    def _():
        acc_ref[...] = jnp.zeros_like(acc_ref)

    acc_ref[...] += jnp.dot(x_ref[...].astype(w_ref.dtype), w_ref[...],
                            preferred_element_type=jnp.float32)

    @pl.when(k == pl.num_programs(2) - 1)
    def _():
        o_ref[...] = (acc_ref[...] + b_ref[...].astype(jnp.float32)
                      ).astype(o_ref.dtype)


# ---------------------------------------------------------------------------
# Static tile selection
# ---------------------------------------------------------------------------

def _round_up(v, mult):
    return ((v + mult - 1) // mult) * mult


def _vmem_limit_bytes():
    """Per-generation VMEM budget (v7x only has 64 MiB physical)."""
    try:
        kind = jax.devices()[0].device_kind.lower()
    except Exception:  # pragma: no cover - defensive
        kind = ""
    if "v7" in kind:
        return 48 * 1024 * 1024
    if "v5" in kind or "v6" in kind:
        return 96 * 1024 * 1024
    return 48 * 1024 * 1024


def _choose_tiles(m, k, n, w_itemsize,
                  tm_max=512, tn_max=2048, tk_max=2048):
    """Static (Python-level) tile selection from the real problem shapes.

    Returns (tm, tn, tk, pad_k) where pad_k is zero-padding applied to K so
    that tk always divides the (padded) K exactly.
    """
    # With f32 weights, cap tk so the double-buffered weight tile stays
    # within ~16 MiB (v7x budget headroom); bf16 weights keep the full cap.
    if w_itemsize >= 4:
        tk_max = min(tk_max, 1024)

    # M tile: multiple of 16 (bf16/f32-safe sublane packing), or full M.
    tm = m if m <= tm_max else tm_max
    # N tile: multiple of 128 (lane-dense vocab output), or full N.
    tn = n if n <= tn_max else tn_max

    # K tile: prefer the largest 128-multiple <= tk_max dividing K; else
    # pick tk_max and zero-pad K up to a multiple of it in the wrapper.
    if k <= tk_max:
        tk, pad_k = k, 0
    else:
        tk = None
        for cand in range(tk_max, 127, -128):
            if k % cand == 0:
                tk = cand
                break
        if tk is None:
            tk = tk_max
            pad_k = _round_up(k, tk) - k
        else:
            pad_k = 0

    # v7x has 2 TensorCores: make sure the "parallel" grid axes have at
    # least 2 tiles when there is enough work to split.
    mt, nt = pl.cdiv(m, tm), pl.cdiv(n, tn)
    if mt * nt < 2:
        if tn >= 256:
            tn = max(128, (tn // 2 // 128) * 128)
        elif tm >= 32:
            tm = max(16, (tm // 2 // 16) * 16)

    return tm, tn, tk, pad_k


# ---------------------------------------------------------------------------
# pallas_call wrappers
# ---------------------------------------------------------------------------

@functools.partial(jax.jit, static_argnames=("tm", "tn", "tk", "vmem_limit"))
def _linear_forward_2d(x2d, w_t, b2d, *, tm, tn, tk, vmem_limit):
    m, kdim = x2d.shape
    n = w_t.shape[1]
    nm, nn, nk = pl.cdiv(m, tm), pl.cdiv(n, tn), pl.cdiv(kdim, tk)
    out_shape = jax.ShapeDtypeStruct((m, n), x2d.dtype)

    if nk == 1:
        # Whole K in one block: 2-D grid, no accumulator scratch, x block
        # index is constant along the vocab axis (DMA'd once per row block).
        return pl.pallas_call(
            _linear_kernel_single_k,
            out_shape=out_shape,
            grid_spec=pltpu.PrefetchScalarGridSpec(
                num_scalar_prefetch=0,
                grid=(nm, nn),
                in_specs=[
                    pl.BlockSpec((tm, tk), lambda i, j: (i, 0)),   # x rows
                    pl.BlockSpec((tk, tn), lambda i, j: (0, j)),   # weight
                    pl.BlockSpec((1, tn), lambda i, j: (0, j)),    # bias
                ],
                out_specs=pl.BlockSpec((tm, tn), lambda i, j: (i, j)),
            ),
            compiler_params=pltpu.CompilerParams(
                dimension_semantics=("parallel", "parallel"),
                vmem_limit_bytes=vmem_limit,
            ),
        )(x2d, w_t, b2d)

    # K-tiled path: f32 VMEM accumulator with init/finalize via pl.when.
    # TODO(synk): try pipeline_mode=pl.Buffered(3) on the weight BlockSpec if
    # profiling ever shows exposed weight DMA on v6e.
    return pl.pallas_call(
        _linear_kernel_tiled_k,
        out_shape=out_shape,
        grid_spec=pltpu.PrefetchScalarGridSpec(
            num_scalar_prefetch=0,
            grid=(nm, nn, nk),
            in_specs=[
                pl.BlockSpec((tm, tk), lambda i, j, k: (i, k)),    # x rows
                pl.BlockSpec((tk, tn), lambda i, j, k: (k, j)),    # weight
                pl.BlockSpec((1, tn), lambda i, j, k: (0, j)),     # bias
            ],
            out_specs=pl.BlockSpec((tm, tn), lambda i, j, k: (i, j)),
            scratch_shapes=[pltpu.VMEM((tm, tn), jnp.float32)],
        ),
        compiler_params=pltpu.CompilerParams(
            dimension_semantics=("parallel", "parallel", "arbitrary"),
            vmem_limit_bytes=vmem_limit,
        ),
    )(x2d, w_t, b2d)


def prepare_weight(weight, dtype=jnp.bfloat16):
    """Transpose the PyTorch-convention weight [out, in] -> [in, out] ONCE
    and cast it to the streaming dtype (bf16 halves HBM weight traffic and
    uses the bf16-native MXU; accumulation stays in f32)."""
    return jnp.asarray(weight).T.astype(dtype)


def classifier_forward(x, weight_t, bias,
                       *, tm_max=512, tn_max=2048, tk_max=2048):
    """nn.Linear forward: x @ weight_t + bias.

    x:        [..., in_features]
    weight_t: [in_features, out_features]  (pre-transposed, see prepare_weight)
    bias:     [out_features]
    """
    in_features = x.shape[-1]
    out_features = weight_t.shape[1]
    lead_shape = x.shape[:-1]
    m = 1
    for d in lead_shape:
        m *= d

    w_itemsize = jnp.dtype(weight_t.dtype).itemsize
    tm, tn, tk, pad_k = _choose_tiles(
        m, in_features, out_features, w_itemsize, tm_max, tn_max, tk_max)

    x2d = x.reshape(m, in_features)
    w2d = weight_t
    if pad_k:
        # Zero-pad K so a bounded K tile divides exactly (keeps the reduction
        # numerically intact and the double-buffered weight tile within VMEM).
        x2d = jnp.pad(x2d, ((0, 0), (0, pad_k)))
        w2d = jnp.pad(w2d, ((0, pad_k), (0, 0)))
    b2d = bias.reshape(1, out_features)

    out2d = _linear_forward_2d(x2d, w2d, b2d, tm=tm, tn=tn, tk=tk,
                               vmem_limit=_vmem_limit_bytes())
    return out2d.reshape(*lead_shape, out_features)


if __name__ == "__main__":
    # Small shapes consistent with a seq2seq decoder feeding the classifier:
    # batch=2, seq=8, hidden(in_features)=32, vocab(out_features)=128.
    batch, seq, in_features, out_features = 2, 8, 32, 128
    init_weight = 0.1

    key = jax.random.PRNGKey(0)
    kx, kw, kb = jax.random.split(key, 3)

    x = jax.random.normal(kx, (batch, seq, in_features), dtype=jnp.float32)
    # Deterministic uniform(-init_weight, init_weight) init, as in the module.
    weight = jax.random.uniform(
        kw, (out_features, in_features), dtype=jnp.float32,
        minval=-init_weight, maxval=init_weight)
    bias = jax.random.uniform(
        kb, (out_features,), dtype=jnp.float32,
        minval=-init_weight, maxval=init_weight)

    # Transpose + bf16-cast the weight once at "init", not in the forward.
    weight_t = prepare_weight(weight)

    out = classifier_forward(x, weight_t, bias)
    jax.block_until_ready(out)

    # Correctness check against plain-JAX f32 reference (same math as
    # nn.Linear).  Tolerance is relaxed because the weight is streamed in
    # bf16 (f32 accumulation is kept inside the kernel).
    ref = x @ weight.T + bias
    assert out.shape == (batch, seq, out_features)
    assert out.dtype == x.dtype
    assert jnp.allclose(out, ref, atol=5e-2, rtol=5e-2)

    print("KERNEL_OK")
</pallas_src>

<mosaic_0001>
module attributes {stable_mosaic.version = 11 : i64} {
  func.func @_linear_kernel_single_k(%arg0: i32, %arg1: i32, %arg2: memref<16x32xf32, #tpu.memory_space<vmem>>, %arg3: memref<32x128xbf16, #tpu.memory_space<vmem>>, %arg4: memref<1x128xf32, #tpu.memory_space<vmem>>, %arg5: memref<16x128xf32, #tpu.memory_space<vmem>>) attributes {dimension_semantics = [#tpu.dimension_semantics<parallel>, #tpu.dimension_semantics<parallel>], iteration_bounds = array<i64: 1, 1>, scalar_prefetch = 0 : i64, scratch_operands = 0 : i64, tpu.core_type = #tpu.core_type<tc>, window_params = [{transform_indices = @transform_0, window_bounds = array<i64: 16, 32>}, {transform_indices = @transform_1, window_bounds = array<i64: 32, 128>}, {transform_indices = @transform_2, window_bounds = array<i64: 1, 128>}, {transform_indices = @transform_3, window_bounds = array<i64: 16, 128>}]} {
    %c0 = arith.constant 0 : index
    %c0_0 = arith.constant 0 : index
    %0 = vector.load %arg2[%c0, %c0_0] : memref<16x32xf32, #tpu.memory_space<vmem>>, vector<16x32xf32>
    %1 = arith.truncf %0 : vector<16x32xf32> to vector<16x32xbf16>
    %c0_1 = arith.constant 0 : index
    %c0_2 = arith.constant 0 : index
    %2 = vector.load %arg3[%c0_1, %c0_2] : memref<32x128xbf16, #tpu.memory_space<vmem>>, vector<32x128xbf16>
    %cst = arith.constant dense<0.000000e+00> : vector<16x128xf32>
    %3 = tpu.matmul %1, %2, %cst {dimension_numbers = #tpu.dot_dimension_numbers<[1], [0], [0], [1], [0, 0, 1, 1], [], []>} : vector<16x32xbf16>, vector<32x128xbf16>, vector<16x128xf32> -> vector<16x128xf32>
    %c0_3 = arith.constant 0 : index
    %c0_4 = arith.constant 0 : index
    %4 = vector.load %arg4[%c0_3, %c0_4] : memref<1x128xf32, #tpu.memory_space<vmem>>, vector<1x128xf32>
    %5 = vector.broadcast %4 : vector<1x128xf32> to vector<16x128xf32>
    %6 = arith.addf %3, %5 : vector<16x128xf32>
    %c0_5 = arith.constant 0 : index
    %c0_6 = arith.constant 0 : index
    %7 = vector.load %arg5[%c0_5, %c0_6] : memref<16x128xf32, #tpu.memory_space<vmem>>, vector<16x128xf32>
    tpu.vector_store %arg5[%c0_5, %c0_6], %6 {strides = array<i32>} : memref<16x128xf32, #tpu.memory_space<vmem>>, vector<16x128xf32>,
    return
  }
  func.func @transform_0(%arg0: i32, %arg1: i32) -> (i32, i32) {
    %c0_i32 = arith.constant 0 : i32
    %c0_i32_0 = arith.constant 0 : i32
    return %arg0, %c0_i32 : i32, i32
  }
  func.func @transform_1(%arg0: i32, %arg1: i32) -> (i32, i32) {
    %c0_i32 = arith.constant 0 : i32
    %c0_i32_0 = arith.constant 0 : i32
    return %c0_i32, %arg1 : i32, i32
  }
  func.func @transform_2(%arg0: i32, %arg1: i32) -> (i32, i32) {
    %c0_i32 = arith.constant 0 : i32
    %c0_i32_0 = arith.constant 0 : i32
    return %c0_i32, %arg1 : i32, i32
  }
  func.func @transform_3(%arg0: i32, %arg1: i32) -> (i32, i32) {
    %c0_i32 = arith.constant 0 : i32
    return %arg0, %arg1 : i32, i32
  }
}

</mosaic_0001>

<llo_original>
// kernel: _linear_forward_2d.1
$region0: #{_linear_forward_2d.1}
  #allocation0 [shape = 'u32[]', space=smem, size = 0x4, offset = 0x4, fixed_abs, tag = 'smem constant byte address 0x4 - core index']
  #allocation1 [shape = 'u32[72,128]{1,0:T(1,128)}', space=vmem, size = 0x9000, scoped, tag = 'internal scratch']
  %s0 = inlined_call_operand.hbm [shape: f32[16,32], index: 0, kind: input, shape index: {}]
  %s1 = inlined_call_operand.hbm [shape: bf16[32,128], index: 1, kind: input, shape index: {}]
  %s2 = inlined_call_operand.vmem [shape: f32[1,128], index: 2, kind: input, shape index: {}]
  %s3 = inlined_call_operand.hbm [shape: f32[16,128], index: 3, kind: output, shape index: {}]
  %s4 = sld [smem:[#allocation0]]
  $region30: #{_linear_forward_2d.1} parent=0
    _
  %s6 = ssub.s32 1, %s4
  %s7 = scalar_select 0, %s6, %s4
  $region1: #{_linear_forward_2d.1} parent=0
    #allocation2 [shape = 'u8[8192]{0}', space=vmem, size = 0x2000, scoped, tag = 'input window, operand 0, single buffered']
    #allocation3 [shape = 's32[1]{0}', space=sflag, size = 0x4, scoped, tag = 'scoped memory for _linear_forward_2d.1']
    #allocation4 [shape = 's32[1]{0}', space=sflag, size = 0x4, scoped, tag = 'scoped memory for _linear_forward_2d.1']
    #allocation5 [shape = 'u8[8192]{0}', space=vmem, size = 0x2000, scoped, tag = 'input window, operand 1, single buffered']
    #allocation6 [shape = 's32[1]{0}', space=sflag, size = 0x4, scoped, tag = 'scoped memory for _linear_forward_2d.1']
    #allocation7 [shape = 'u8[8192]{0}', space=vmem, size = 0x2000, scoped, tag = 'output window, operand 0, single buffered']
    %8 = vsyncpa [#allocation3], 0
    %9 = vsyncpa [#allocation6], 0
    %10 = vsyncpa [#allocation4], 0
    // Predicated region
    $region2: #{_linear_forward_2d.1} parent=1 // pred_check
      _
    $region3: #{_linear_forward_2d.1} parent=1 // pred_check_branch
      %12 = sbr.rel (0) target = $region5
    $region4: #{_linear_forward_2d.1} parent=1 // pred_region
      %14 = vsyncadd [#allocation3], 0
      %s15 = sshll.u32 %s0, 4
      %s16 = int_to_ptr.hbm [resolvable:$true] %s15
      %s17 = sshll.u32 [#allocation2], 4
      %s18 = int_to_ptr.vmem [resolvable:$true] %s17
      %23 = dma.hbm_to_vmem [thread:$0]  %s16, 256, %s18, [#allocation3], 128, 128, 8
    $region5: #{_linear_forward_2d.1} parent=1 // pred_fallthru
      _
    // Predicated region
    $region6: #{_linear_forward_2d.1} parent=1 // pred_check
      _
    $region7: #{_linear_forward_2d.1} parent=1 // pred_check_branch
      %25 = sbr.rel (0) target = $region9
    $region8: #{_linear_forward_2d.1} parent=1 // pred_region
      %27 = vsyncadd [#allocation6], 0
      %s28 = sshll.u32 %s1, 4
      %s29 = int_to_ptr.hbm [resolvable:$true] %s28
      %s30 = sshll.u32 [#allocation5], 4
      %s31 = int_to_ptr.vmem [resolvable:$true] %s30
      %36 = dma.hbm_to_vmem [thread:$0]  %s29, 256, %s31, [#allocation6], 64, 64, 4
    $region9: #{_linear_forward_2d.1} parent=1 // pred_fallthru
      _
    // Predicated region
    $region10: #{_linear_forward_2d.1} parent=1 // pred_check
      _
    $region11: #{_linear_forward_2d.1} parent=1 // pred_check_branch
      %38 = sbr.rel (0) target = $region13
    $region12: #{_linear_forward_2d.1} parent=1 // pred_region
      _
    $region13: #{_linear_forward_2d.1} parent=1 // pred_fallthru
      _
    // Predicated region
    $region14: #{_linear_forward_2d.1} parent=1 // pred_check
      _
    $region15: #{_linear_forward_2d.1} parent=1 // pred_check_branch
      %40 = sbr.rel (0) target = $region17
    $region16: #{_linear_forward_2d.1} parent=1 // pred_region
      %42 = dma.done [#allocation3], 256
    $region17: #{_linear_forward_2d.1} parent=1 // pred_fallthru
      _
    // Predicated region
    $region18: #{_linear_forward_2d.1} parent=1 // pred_check
      _
    $region19: #{_linear_forward_2d.1} parent=1 // pred_check_branch
      %44 = sbr.rel (0) target = $region21
    $region20: #{_linear_forward_2d.1} parent=1 // pred_region
      %46 = dma.done [#allocation6], 256
    $region21: #{_linear_forward_2d.1} parent=1 // pred_fallthru
      _
    %v48 = vld [vmem:[#allocation2] sm:$0xff]
    %v49 = vld [vmem:[#allocation2 + $0x8] sm:$0xff]
    %v50 = vpack.c.bf16 %v49, %v48
    %v51 = vld [vmem:[#allocation5] sm:$0xf]
    %v52 = vld [vmem:[#allocation5 + $0x4] sm:$0xf]
    %v53 = vld [vmem:[#allocation5 + $0x8] sm:$0xf]
    %v54 = vld [vmem:[#allocation5 + $0xc] sm:$0xf]
    %v55 = vld [vmem:[%s2] sm:$0x1]
    %v57 = vperm.slane %v55, 0
    %v63 = vunpack.c.l.b16 %v51
    %v64 = vunpack.c.l.b16 %v52
    %v65 = vunpack.c.l.b16 %v53
    %v66 = vunpack.c.l.b16 %v54
    %v67 = vpack.c.b16 %v64, %v63
    %v68 = vpack.c.b16 %v66, %v65
    %vm71 = vcmask 261120
    %v73 = vsel %vm71, %v50, 0
    %75 = vmatpush.bf16.msra.mxu0 0
    %76 = vmatpush.bf16.msra.mxu0 0
    %77 = vmatpush.bf16.msra.mxu0 0
    %78 = vmatpush.bf16.msra.mxu0 0
    %79 = vmatpush.bf16.msra.mxu0 0
    %80 = vmatpush.bf16.msra.mxu0 0
    %81 = vmatpush.bf16.msra.mxu0 %v68
    %82 = vmatpush.bf16.msra.mxu0 %v67
    %83 = vmatmul.bf16.gmra.mxu0 %v73
    %v84 = vpop.f32.mrf.mxu0
    %v85 = vadd.f32 %v57, %v84
    %v86 = vpop.f32.mrf.mxu0
    %v87 = vadd.f32 %v57, %v86
    %88 = vdwg.mxu0
    %89 = vst [vmem:[#allocation7] sm:$0xff] %v85
    %90 = vst [vmem:[#allocation7 + $0x8] sm:$0xff] %v87
    // Predicated region
    $region22: #{_linear_forward_2d.1} parent=1 // pred_check
      _
    $region23: #{_linear_forward_2d.1} parent=1 // pred_check_branch
      %92 = sbr.rel (0) target = $region25
    $region24: #{_linear_forward_2d.1} parent=1 // pred_region
      %94 = vsyncadd [#allocation4], 0
      %s95 = sshll.u32 [#allocation7], 4
      %s96 = int_to_ptr.vmem [resolvable:$true] %s95
      %s97 = sshll.u32 %s3, 4
      %s98 = int_to_ptr.hbm [resolvable:$true] %s97
      %103 = dma.vmem_to_hbm [thread:$0]  %s96, 256, %s98, [#allocation4], 128, 128, 8
    $region25: #{_linear_forward_2d.1} parent=1 // pred_fallthru
      _
    // Predicated region
    $region26: #{_linear_forward_2d.1} parent=1 // pred_check
      _
    $region27: #{_linear_forward_2d.1} parent=1 // pred_check_branch
      %105 = sbr.rel (0) target = $region29
    $region28: #{_linear_forward_2d.1} parent=1 // pred_region
      %107 = dma.done [#allocation4], 256
    $region29: #{_linear_forward_2d.1} parent=1 // pred_fallthru
      _
    %108 = vsyncpa [#allocation3], 1
    %109 = vsyncpa [#allocation6], 1
    %110 = vsyncpa [#allocation4], 1

</llo_original>
